<compile_context>
chip_gen: v7x
topology: tpu7x:2x2x1
jax: 0.10.0
libtpu: 0.0.40
codegen_flags: <defaults>
</compile_context>

<pallas_src>
import jax
import jax.numpy as jnp
from jax.experimental import pallas as pl
from jax.experimental.pallas import tpu as pltpu


def _ffn_kernel(x_ref, w1_ref, b1_ref, w2_ref, b2_ref, o_ref, acc_ref):
    # x_ref  : (TM, D)   bf16 token tile
    # w1_ref : (D, TH)   bf16 chunk of W1 (pre-transposed, in->out)
    # b1_ref : (1, TH)   f32 chunk of b1
    # w2_ref : (TH, D)   bf16 chunk of W2 (pre-transposed)
    # b2_ref : (1, D)    f32 full b2
    # o_ref  : (TM, D)   output tile (original x dtype)
    # acc_ref: (TM, D)   f32 accumulator, persists across the H (k) axis
    k = pl.program_id(1)

    @pl.when(k == 0)
    def _():
        acc_ref[...] = jnp.zeros_like(acc_ref)

    # First matmul chunk: (TM, D) x (D, TH) -> f32 (TM, TH)
    h = jnp.dot(x_ref[...], w1_ref[...], preferred_element_type=jnp.float32)
    h = jnp.maximum(h + b1_ref[...], 0.0)          # bias + ReLU in f32
    # dropout(p=0.1) in eval mode == identity.

    # Second matmul chunk accumulates into f32 scratch: (TM, TH) x (TH, D)
    acc_ref[...] += jnp.dot(h.astype(w2_ref.dtype), w2_ref[...],
                            preferred_element_type=jnp.float32)

    @pl.when(k == pl.num_programs(1) - 1)
    def _():
        # b2 added exactly once, in the finalize branch.
        o_ref[...] = (acc_ref[...] + b2_ref[...]).astype(o_ref.dtype)


def _round_up(a, b):
    return (a + b - 1) // b * b


def positionwise_ffn(x, w1, b1, w2, b2, *, tm=256, th=512):
    """x: [B, S, D].  w1: [D, H], b1: [H], w2: [H, D], b2: [D]."""
    B, S, D = x.shape
    H = w1.shape[1]
    N = B * S

    # Token row tile: large for MXU utilization; shrink for tiny inputs.
    tm = min(tm, _round_up(N, 8))
    n_pad = _round_up(N, tm)

    # Hidden tile must divide H; fall back to untiled hidden dim otherwise.
    th = min(th, H)
    if H % th != 0:
        th = H

    cdt = jnp.bfloat16
    x2d = x.reshape(N, D)
    if n_pad != N:
        x2d = jnp.pad(x2d, ((0, n_pad - N), (0, 0)))
    x2d = x2d.astype(cdt)
    w1c = w1.astype(cdt)
    w2c = w2.astype(cdt)
    b1_2d = b1.reshape(1, H).astype(jnp.float32)
    b2_2d = b2.reshape(1, D).astype(jnp.float32)

    out_itemsize = jnp.dtype(x.dtype).itemsize
    cost = pl.CostEstimate(
        flops=4 * n_pad * D * H,                       # two matmuls
        transcendentals=0,
        bytes_accessed=(x2d.size * 2 + w1c.size * 2 + w2c.size * 2
                        + b1_2d.size * 4 + b2_2d.size * 4
                        + n_pad * D * out_itemsize))

    out2d = pl.pallas_call(
        _ffn_kernel,
        out_shape=jax.ShapeDtypeStruct((n_pad, D), x.dtype),
        grid_spec=pltpu.PrefetchScalarGridSpec(
            num_scalar_prefetch=0,
            grid=(n_pad // tm, H // th),               # (token tiles, H chunks)
            in_specs=[
                pl.BlockSpec((tm, D), lambda i, k: (i, 0)),   # x tile
                pl.BlockSpec((D, th), lambda i, k: (0, k)),   # w1 chunk
                pl.BlockSpec((1, th), lambda i, k: (0, k)),   # b1 chunk
                pl.BlockSpec((th, D), lambda i, k: (k, 0)),   # w2 chunk
                pl.BlockSpec((1, D), lambda i, k: (0, 0)),    # b2 (constant)
            ],
            out_specs=pl.BlockSpec((tm, D), lambda i, k: (i, 0)),
            scratch_shapes=[pltpu.VMEM((tm, D), jnp.float32)],
        ),
        compiler_params=pltpu.CompilerParams(
            dimension_semantics=("parallel", "arbitrary"),
            vmem_limit_bytes=64 * 1024 * 1024),
        cost_estimate=cost,
    )(x2d, w1c, b1_2d, w2c, b2_2d)

    return out2d[:N].reshape(B, S, D)


def init_params(key, model_dim, d_hidden, dtype=jnp.float32):
    """Xavier-normal init with gain = calculate_gain('relu') = sqrt(2)."""
    gain = jnp.sqrt(2.0)
    k1, k2 = jax.random.split(key)
    std1 = gain * jnp.sqrt(2.0 / (model_dim + d_hidden))
    std2 = gain * jnp.sqrt(2.0 / (d_hidden + model_dim))
    # PyTorch Linear weight is (out, in); we store transposed (in, out).
    w1 = (jax.random.normal(k1, (model_dim, d_hidden)) * std1).astype(dtype)
    w2 = (jax.random.normal(k2, (d_hidden, model_dim)) * std2).astype(dtype)
    # nn.Linear biases keep their default init; use zeros deterministically.
    b1 = jnp.zeros((d_hidden,), dtype)
    b2 = jnp.zeros((model_dim,), dtype)
    return w1, b1, w2, b2


def _reference(x, w1, b1, w2, b2):
    # Reference with the same bf16-input / f32-accumulate numerics as the kernel.
    xb = x.astype(jnp.bfloat16)
    w1b = w1.astype(jnp.bfloat16)
    w2b = w2.astype(jnp.bfloat16)
    h = jnp.dot(xb, w1b, preferred_element_type=jnp.float32) + b1
    h = jnp.maximum(h, 0.0)
    o = jnp.dot(h.astype(jnp.bfloat16), w2b,
                preferred_element_type=jnp.float32) + b2
    return o.astype(x.dtype)


if __name__ == "__main__":
    key = jax.random.PRNGKey(0)
    kx, kp = jax.random.split(key)

    batch, seq, model_dim, d_hidden = 2, 8, 32, 64
    x = jax.random.normal(kx, (batch, seq, model_dim), jnp.float32)
    w1, b1, w2, b2 = init_params(kp, model_dim, d_hidden)

    out = positionwise_ffn(x, w1, b1, w2, b2)
    out = jax.block_until_ready(out)

    ref = _reference(x, w1, b1, w2, b2)
    assert out.shape == x.shape
    assert jnp.allclose(out, ref, atol=1e-2, rtol=1e-2), (
        float(jnp.max(jnp.abs(out - ref))))

    print("KERNEL_OK")
</pallas_src>

<mosaic_0001>
module attributes {stable_mosaic.version = 11 : i64} {
  func.func @_ffn_kernel(%arg0: i32, %arg1: i32, %arg2: memref<16x32xbf16, #tpu.memory_space<vmem>>, %arg3: memref<32x64xbf16, #tpu.memory_space<vmem>>, %arg4: memref<1x64xf32, #tpu.memory_space<vmem>>, %arg5: memref<64x32xbf16, #tpu.memory_space<vmem>>, %arg6: memref<1x32xf32, #tpu.memory_space<vmem>>, %arg7: memref<16x32xf32, #tpu.memory_space<vmem>>, %arg8: memref<16x32xf32, #tpu.memory_space<vmem>>) attributes {dimension_semantics = [#tpu.dimension_semantics<parallel>, #tpu.dimension_semantics<arbitrary>], iteration_bounds = array<i64: 1, 1>, scalar_prefetch = 0 : i64, scratch_operands = 1 : i64, tpu.core_type = #tpu.core_type<tc>, window_params = [{transform_indices = @transform_0, window_bounds = array<i64: 16, 32>}, {transform_indices = @transform_1, window_bounds = array<i64: 32, 64>}, {transform_indices = @transform_2, window_bounds = array<i64: 1, 64>}, {transform_indices = @transform_3, window_bounds = array<i64: 64, 32>}, {pipeline_mode = #tpu.pipeline_mode<synchronous>, transform_indices = @transform_4, window_bounds = array<i64: 1, 32>}, {transform_indices = @transform_5, window_bounds = array<i64: 16, 32>}]} {
    %c0_i32 = arith.constant 0 : i32
    %0 = arith.cmpi eq, %arg1, %c0_i32 : i32
    %1 = arith.extui %0 : i1 to i32
    %c0_i32_0 = arith.constant 0 : i32
    %2 = arith.cmpi ne, %1, %c0_i32_0 : i32
    scf.if %2 {
      %cst_16 = arith.constant 0.000000e+00 : f32
      %20 = vector.broadcast %cst_16 : f32 to vector<16x32xf32>
      %c0_17 = arith.constant 0 : index
      %c0_18 = arith.constant 0 : index
      %21 = vector.load %arg8[%c0_17, %c0_18] : memref<16x32xf32, #tpu.memory_space<vmem>>, vector<16x32xf32>
      tpu.vector_store %arg8[%c0_17, %c0_18], %20 {strides = array<i32>} : memref<16x32xf32, #tpu.memory_space<vmem>>, vector<16x32xf32>,
    } else {
    }
    %c0 = arith.constant 0 : index
    %c0_1 = arith.constant 0 : index
    %3 = vector.load %arg2[%c0, %c0_1] : memref<16x32xbf16, #tpu.memory_space<vmem>>, vector<16x32xbf16>
    %c0_2 = arith.constant 0 : index
    %c0_3 = arith.constant 0 : index
    %4 = vector.load %arg3[%c0_2, %c0_3] : memref<32x64xbf16, #tpu.memory_space<vmem>>, vector<32x64xbf16>
    %cst = arith.constant dense<0.000000e+00> : vector<16x64xf32>
    %5 = tpu.matmul %3, %4, %cst {dimension_numbers = #tpu.dot_dimension_numbers<[1], [0], [0], [1], [0, 0, 1, 1], [], []>} : vector<16x32xbf16>, vector<32x64xbf16>, vector<16x64xf32> -> vector<16x64xf32>
    %c0_4 = arith.constant 0 : index
    %c0_5 = arith.constant 0 : index
    %6 = vector.load %arg4[%c0_4, %c0_5] : memref<1x64xf32, #tpu.memory_space<vmem>>, vector<1x64xf32>
    %7 = vector.broadcast %6 : vector<1x64xf32> to vector<16x64xf32>
    %8 = arith.addf %5, %7 : vector<16x64xf32>
    %cst_6 = arith.constant 0.000000e+00 : f32
    %9 = vector.broadcast %cst_6 : f32 to vector<16x64xf32>
    %10 = arith.maximumf %8, %9 : vector<16x64xf32>
    %c0_7 = arith.constant 0 : index
    %c0_8 = arith.constant 0 : index
    %11 = vector.load %arg8[%c0_7, %c0_8] : memref<16x32xf32, #tpu.memory_space<vmem>>, vector<16x32xf32>
    %12 = arith.truncf %10 : vector<16x64xf32> to vector<16x64xbf16>
    %c0_9 = arith.constant 0 : index
    %c0_10 = arith.constant 0 : index
    %13 = vector.load %arg5[%c0_9, %c0_10] : memref<64x32xbf16, #tpu.memory_space<vmem>>, vector<64x32xbf16>
    %cst_11 = arith.constant dense<0.000000e+00> : vector<16x32xf32>
    %14 = tpu.matmul %12, %13, %cst_11 {dimension_numbers = #tpu.dot_dimension_numbers<[1], [0], [0], [1], [0, 0, 1, 1], [], []>} : vector<16x64xbf16>, vector<64x32xbf16>, vector<16x32xf32> -> vector<16x32xf32>
    %15 = arith.addf %11, %14 : vector<16x32xf32>
    %c0_12 = arith.constant 0 : index
    %c0_13 = arith.constant 0 : index
    %16 = vector.load %arg8[%c0_12, %c0_13] : memref<16x32xf32, #tpu.memory_space<vmem>>, vector<16x32xf32>
    tpu.vector_store %arg8[%c0_12, %c0_13], %15 {strides = array<i32>} : memref<16x32xf32, #tpu.memory_space<vmem>>, vector<16x32xf32>,
    %c0_i32_14 = arith.constant 0 : i32
    %17 = arith.cmpi eq, %arg1, %c0_i32_14 : i32
    %18 = arith.extui %17 : i1 to i32
    %c0_i32_15 = arith.constant 0 : i32
    %19 = arith.cmpi ne, %18, %c0_i32_15 : i32
    scf.if %19 {
      %c0_16 = arith.constant 0 : index
      %c0_17 = arith.constant 0 : index
      %20 = vector.load %arg8[%c0_16, %c0_17] : memref<16x32xf32, #tpu.memory_space<vmem>>, vector<16x32xf32>
      %c0_18 = arith.constant 0 : index
      %c0_19 = arith.constant 0 : index
      %21 = vector.load %arg6[%c0_18, %c0_19] : memref<1x32xf32, #tpu.memory_space<vmem>>, vector<1x32xf32>
      %22 = vector.broadcast %21 : vector<1x32xf32> to vector<16x32xf32>
      %23 = arith.addf %20, %22 : vector<16x32xf32>
      %c0_20 = arith.constant 0 : index
      %c0_21 = arith.constant 0 : index
      %24 = vector.load %arg7[%c0_20, %c0_21] : memref<16x32xf32, #tpu.memory_space<vmem>>, vector<16x32xf32>
      tpu.vector_store %arg7[%c0_20, %c0_21], %23 {strides = array<i32>} : memref<16x32xf32, #tpu.memory_space<vmem>>, vector<16x32xf32>,
    } else {
    }
    return
  }
  func.func @transform_0(%arg0: i32, %arg1: i32) -> (i32, i32) {
    %c0_i32 = arith.constant 0 : i32
    %c0_i32_0 = arith.constant 0 : i32
    return %arg0, %c0_i32 : i32, i32
  }
  func.func @transform_1(%arg0: i32, %arg1: i32) -> (i32, i32) {
    %c0_i32 = arith.constant 0 : i32
    %c0_i32_0 = arith.constant 0 : i32
    return %c0_i32, %arg1 : i32, i32
  }
  func.func @transform_2(%arg0: i32, %arg1: i32) -> (i32, i32) {
    %c0_i32 = arith.constant 0 : i32
    %c0_i32_0 = arith.constant 0 : i32
    return %c0_i32, %arg1 : i32, i32
  }
  func.func @transform_3(%arg0: i32, %arg1: i32) -> (i32, i32) {
    %c0_i32 = arith.constant 0 : i32
    %c0_i32_0 = arith.constant 0 : i32
    return %arg1, %c0_i32 : i32, i32
  }
  func.func @transform_4(%arg0: i32, %arg1: i32) -> (i32, i32) {
    %c0_i32 = arith.constant 0 : i32
    %c0_i32_0 = arith.constant 0 : i32
    %c0_i32_1 = arith.constant 0 : i32
    return %c0_i32, %c0_i32_0 : i32, i32
  }
  func.func @transform_5(%arg0: i32, %arg1: i32) -> (i32, i32) {
    %c0_i32 = arith.constant 0 : i32
    %c0_i32_0 = arith.constant 0 : i32
    return %arg0, %c0_i32 : i32, i32
  }
}

</mosaic_0001>

<llo_original>
// kernel: tpu_custom_call.1
$region0: #{tpu_custom_call.1}
  #allocation0 [shape = 'u32[]', space=smem, size = 0x4, offset = 0x4, fixed_abs, tag = 'smem constant byte address 0x4 - core index']
  #allocation1 [shape = 'u32[144,128]{1,0:T(1,128)}', space=vmem, size = 0x12000, scoped, tag = 'internal scratch']
  #allocation2 [shape = 'f32[16,32]{1,0:T(8,128)}', space=vmem, size = 0x2000, scoped, tag = 'scratch operand']
  %s0 = inlined_call_operand.hbm [shape: bf16[16,32], index: 0, kind: input, shape index: {}]
  %s1 = inlined_call_operand.hbm [shape: bf16[32,64], index: 1, kind: input, shape index: {}]
  %s2 = inlined_call_operand.hbm [shape: f32[1,64], index: 2, kind: input, shape index: {}]
  %s3 = inlined_call_operand.hbm [shape: bf16[64,32], index: 3, kind: input, shape index: {}]
  %s4 = inlined_call_operand.hbm [shape: f32[1,32], index: 4, kind: input, shape index: {}]
  %s5 = inlined_call_operand.hbm [shape: f32[16,32], index: 5, kind: output, shape index: {}]
  %s6 = sld [smem:[#allocation0]]
  $region58: #{tpu_custom_call.1} parent=0
    _
  %s8 = ssub.s32 1, %s6
  %s9 = scalar_select 0, %s8, %s6
  $region1: #{tpu_custom_call.1} parent=0
    #allocation3 [shape = 'u8[4096]{0}', space=vmem, size = 0x1000, scoped, tag = 'input window, operand 0, single buffered']
    #allocation4 [shape = 's32[1]{0}', space=sflag, size = 0x4, scoped, tag = 'scoped memory for tpu_custom_call.1']
    #allocation5 [shape = 's32[1]{0}', space=sflag, size = 0x4, scoped, tag = 'scoped memory for tpu_custom_call.1']
    #allocation6 [shape = 'u8[8192]{0}', space=vmem, size = 0x2000, scoped, tag = 'input window, operand 1, single buffered']
    #allocation7 [shape = 's32[1]{0}', space=sflag, size = 0x4, scoped, tag = 'scoped memory for tpu_custom_call.1']
    #allocation8 [shape = 'u8[512]{0}', space=vmem, size = 0x400, scoped, tag = 'input window, operand 2, single buffered']
    #allocation9 [shape = 'u8[16384]{0}', space=vmem, size = 0x4000, scoped, tag = 'input window, operand 3, single buffered']
    #allocation10 [shape = 's32[1]{0}', space=sflag, size = 0x4, scoped, tag = 'scoped memory for tpu_custom_call.1']
    #allocation11 [shape = 'u8[512]{0}', space=vmem, size = 0x400, scoped, tag = 'input window, operand 4, single buffered']
    #allocation12 [shape = 'u8[8192]{0}', space=vmem, size = 0x2000, scoped, tag = 'output window, operand 0, single buffered']
    %10 = vsyncpa [#allocation4], 0
    %11 = vsyncpa [#allocation7], 0
    %12 = vsyncpa [#allocation10], 0
    %13 = vsyncpa [#allocation5], 0
    // Predicated region
    $region2: #{tpu_custom_call.1} parent=1 // pred_check
      _
    $region3: #{tpu_custom_call.1} parent=1 // pred_check_branch
      %15 = sbr.rel (0) target = $region5
    $region4: #{tpu_custom_call.1} parent=1 // pred_region
      %s17 = ssub.s32 128, 128
      %18 = vsyncadd [#allocation4], %s17
      %s19 = sshll.u32 [#allocation3], 4
      %s20 = int_to_ptr.vmem [resolvable:$true] %s19
      %25 = dma.hbm_to_vmem [thread:$0]  %s0, 128, %s20, [#allocation4], 64, 64, 4
    $region5: #{tpu_custom_call.1} parent=1 // pred_fallthru
      _
    // Predicated region
    $region6: #{tpu_custom_call.1} parent=1 // pred_check
      _
    $region7: #{tpu_custom_call.1} parent=1 // pred_check_branch
      %27 = sbr.rel (0) target = $region9
    $region8: #{tpu_custom_call.1} parent=1 // pred_region
      %s29 = ssub.s32 256, 256
      %30 = vsyncadd [#allocation7], %s29
      %s31 = sshll.u32 [#allocation6], 4
      %s32 = int_to_ptr.vmem [resolvable:$true] %s31
      %37 = dma.hbm_to_vmem [thread:$0]  %s1, 256, %s32, [#allocation7], 64, 64, 4
    $region9: #{tpu_custom_call.1} parent=1 // pred_fallthru
      _
    // Predicated region
    $region10: #{tpu_custom_call.1} parent=1 // pred_check
      _
    $region11: #{tpu_custom_call.1} parent=1 // pred_check_branch
      %39 = sbr.rel (0) target = $region13
    $region12: #{tpu_custom_call.1} parent=1 // pred_region
      %s41 = ssub.s32 16, 16
      %42 = vsyncadd [#allocation7], %s41
      %s44 = sshll.u32 [#allocation8], 4
      %s45 = int_to_ptr.vmem [resolvable:$true] %s44
      %47 = dma.hbm_to_vmem [thread:$0]  %s2, 16, %s45, [#allocation7]
    $region13: #{tpu_custom_call.1} parent=1 // pred_fallthru
      _
    // Predicated region
    $region14: #{tpu_custom_call.1} parent=1 // pred_check
      _
    $region15: #{tpu_custom_call.1} parent=1 // pred_check_branch
      %49 = sbr.rel (0) target = $region17
    $region16: #{tpu_custom_call.1} parent=1 // pred_region
      %s51 = ssub.s32 512, 512
      %52 = vsyncadd [#allocation10], %s51
      %s53 = sshll.u32 [#allocation9], 4
      %s54 = int_to_ptr.vmem [resolvable:$true] %s53
      %59 = dma.hbm_to_vmem [thread:$0]  %s3, 512, %s54, [#allocation10], 64, 64, 4
    $region17: #{tpu_custom_call.1} parent=1 // pred_fallthru
      _
    // Predicated region
    $region18: #{tpu_custom_call.1} parent=1 // pred_check
      _
    $region19: #{tpu_custom_call.1} parent=1 // pred_check_branch
      %61 = sbr.rel (0) target = $region21
    $region20: #{tpu_custom_call.1} parent=1 // pred_region
      %s63 = ssub.s32 16, 16
      %64 = vsyncadd [#allocation10], %s63
      %s66 = sshll.u32 [#allocation11], 4
      %s67 = int_to_ptr.vmem [resolvable:$true] %s66
      %69 = dma.hbm_to_vmem [thread:$0]  %s4, 16, %s67, [#allocation10]
    $region21: #{tpu_custom_call.1} parent=1 // pred_fallthru
      _
    // Predicated region
    $region22: #{tpu_custom_call.1} parent=1 // pred_check
      _
    $region23: #{tpu_custom_call.1} parent=1 // pred_check_branch
      %71 = sbr.rel (0) target = $region25
    $region24: #{tpu_custom_call.1} parent=1 // pred_region
      %72 = dma.done [#allocation4], 128
    $region25: #{tpu_custom_call.1} parent=1 // pred_fallthru
      _
    // Predicated region
    $region26: #{tpu_custom_call.1} parent=1 // pred_check
      _
    $region27: #{tpu_custom_call.1} parent=1 // pred_check_branch
      %74 = sbr.rel (0) target = $region29
    $region28: #{tpu_custom_call.1} parent=1 // pred_region
      %75 = dma.done [#allocation7], 256
    $region29: #{tpu_custom_call.1} parent=1 // pred_fallthru
      _
    // Predicated region
    $region30: #{tpu_custom_call.1} parent=1 // pred_check
      _
    $region31: #{tpu_custom_call.1} parent=1 // pred_check_branch
      %77 = sbr.rel (0) target = $region33
    $region32: #{tpu_custom_call.1} parent=1 // pred_region
      %78 = dma.done [#allocation7], 16
    $region33: #{tpu_custom_call.1} parent=1 // pred_fallthru
      _
    // Predicated region
    $region34: #{tpu_custom_call.1} parent=1 // pred_check
      _
    $region35: #{tpu_custom_call.1} parent=1 // pred_check_branch
      %80 = sbr.rel (0) target = $region37
    $region36: #{tpu_custom_call.1} parent=1 // pred_region
      %81 = dma.done [#allocation10], 512
    $region37: #{tpu_custom_call.1} parent=1 // pred_fallthru
      _
    // Predicated region
    $region38: #{tpu_custom_call.1} parent=1 // pred_check
      _
    $region39: #{tpu_custom_call.1} parent=1 // pred_check_branch
      %83 = sbr.rel (0) target = $region41
    $region40: #{tpu_custom_call.1} parent=1 // pred_region
      %84 = dma.done [#allocation10], 16
    $region41: #{tpu_custom_call.1} parent=1 // pred_fallthru
      _
    %p86 = scmp.eq.s32.totalorder 0, 0
    // Predicated region
    $region42: #{tpu_custom_call.1} parent=1 // pred_check
      %p87 = pneg %p86
    $region43: #{tpu_custom_call.1} parent=1 // pred_check_branch
      %89 = sbr.rel (%p87) target = $region45
    $region44: #{tpu_custom_call.1} parent=1 // pred_region
      %vm90 = vcmask 261120
      %91 = vst.msk [vmem:[#allocation2] sm:$0xff] %vm90, 0.0
      %92 = vst.msk [vmem:[#allocation2 + $0x8] sm:$0xff] %vm90, 0.0
    $region45: #{tpu_custom_call.1} parent=1 // pred_fallthru
      _
    %v93 = vld [vmem:[#allocation3] sm:$0xf]
    %v94 = vld [vmem:[#allocation3 + $0x4] sm:$0xf]
    %v95 = vld [vmem:[#allocation6] sm:$0xf]
    %v96 = vld [vmem:[#allocation6 + $0x4] sm:$0xf]
    %v97 = vld [vmem:[#allocation6 + $0x8] sm:$0xf]
    %v98 = vld [vmem:[#allocation6 + $0xc] sm:$0xf]
    %v99 = vld [vmem:[#allocation8] sm:$0x1]
    %v101 = vlaneseq
    %v102 = vshrl.u32 %v101, 7
    %v103 = vsub.s32 0, %v102
    %v104 = vrot.slane %v99, %v103
    %v108 = vunpack.c.l.b16 %v93
    %v109 = vunpack.c.l.b16 %v94
    %v110 = vpack.c.b16 %v109, %v108
    %v115 = vunpack.c.l.b16 %v95
    %v116 = vunpack.c.l.b16 %v96
    %v117 = vunpack.c.l.b16 %v97
    %v118 = vunpack.c.l.b16 %v98
    %v119 = vpack.c.b16 %v116, %v115
    %v120 = vpack.c.b16 %v118, %v117
    %vm123 = vcmask 261120
    %v125 = vsel %vm123, %v110, 0
    %127 = vmatprep.subr.bf16.mxu0 0
    %128 = vmatpush1.bf16.msra.mxu0 %v119
    %129 = vmatprep.subr.bf16.mxu0 0
    %130 = vmatpush1.bf16.msra.mxu0 %v120
    %131 = vmatprep.subr.bf16.mxu0 0
    %132 = vmatpush1.bf16.msra.mxu0 0
    %133 = vmatprep.subr.bf16.mxu0 0
    %134 = vmatpush1.bf16.msra.mxu0 0
    %135 = vmatprep.subr.bf16.mxu0 0
    %136 = vmatpush1.bf16.msra.mxu0 0
    %137 = vmatprep.subr.bf16.mxu0 0
    %138 = vmatpush1.bf16.msra.mxu0 0
    %139 = vmatprep.subr.bf16.mxu0 0
    %140 = vmatpush1.bf16.msra.mxu0 0
    %141 = vmatprep.subr.bf16.mxu0 0
    %142 = vmatpush1.bf16.msra.mxu0 0
    %143 = vmatprep.subr.bf16.mxu0 0
    %144 = vmatpush1.bf16.msra.mxu0 0
    %145 = vmatprep.subr.bf16.mxu0 0
    %146 = vmatpush1.bf16.msra.mxu0 0
    %147 = vmatprep.subr.bf16.mxu0 0
    %148 = vmatpush1.bf16.msra.mxu0 0
    %149 = vmatprep.subr.bf16.mxu0 0
    %150 = vmatpush1.bf16.msra.mxu0 0
    %151 = vmatprep.subr.bf16.mxu0 0
    %152 = vmatpush1.bf16.msra.mxu0 0
    %153 = vmatprep.subr.bf16.mxu0 0
    %154 = vmatpush1.bf16.msra.mxu0 0
    %155 = vmatprep.subr.bf16.mxu0 0
    %156 = vmatpush1.bf16.msra.mxu0 0
    %157 = vmatprep.subr.bf16.mxu0 0
    %158 = vmatpush1.bf16.msra.mxu0 0
    %159 = vmatprep.mubr.bf16.mxu0 0
    %160 = vmatmul.mubr.bf16.gmra.mrb[0].mxu0 %v125
    %v161 = vpop.f32.mrb[0].mxu0
    %v162 = vadd.f32 %v104, %v161
    %v163 = vpop.f32.mrb[0].mxu0
    %v164 = vpop.f32.mrb[0].mxu0
    %v165 = vadd.f32 %v104, %v164
    %v166 = vpop.f32.mrb[0].mxu0
    %167 = vdwg.mxu0
    %v168 = vmax.f32 %v162, 0.0
    %v169 = vmax.f32 %v165, 0.0
    %v170 = vld [vmem:[#allocation2] sm:$0xff]
    %v171 = vld [vmem:[#allocation2 + $0x8] sm:$0xff]
    %v172 = vpack.c.bf16 %v169, %v168
    %v173 = vld [vmem:[#allocation9] sm:$0xf]
    %v174 = vld [vmem:[#allocation9 + $0x4] sm:$0xf]
    %v175 = vld [vmem:[#allocation9 + $0x8] sm:$0xf]
    %v176 = vld [vmem:[#allocation9 + $0xc] sm:$0xf]
    %v177 = vld [vmem:[#allocation9 + $0x10] sm:$0xf]
    %v178 = vld [vmem:[#allocation9 + $0x14] sm:$0xf]
    %v179 = vld [vmem:[#allocation9 + $0x18] sm:$0xf]
    %v180 = vld [vmem:[#allocation9 + $0x1c] sm:$0xf]
    %v189 = vunpack.c.l.b16 %v173
    %v190 = vunpack.c.l.b16 %v174
    %v191 = vunpack.c.l.b16 %v175
    %v192 = vunpack.c.l.b16 %v176
    %v193 = vunpack.c.l.b16 %v177
    %v194 = vunpack.c.l.b16 %v178
    %v195 = vunpack.c.l.b16 %v179
    %v196 = vunpack.c.l.b16 %v180
    %v197 = vpack.c.b16 %v190, %v189
    %v198 = vpack.c.b16 %v192, %v191
    %v199 = vpack.c.b16 %v194, %v193
    %v200 = vpack.c.b16 %v196, %v195
    %vm205 = vcmask 523264
    %v207 = vsel %vm205, %v172, 0
    %209 = vmatprep.subr.bf16.mxu0 0
    %210 = vmatpush1.bf16.msra.mxu0 %v197
    %211 = vmatprep.subr.bf16.mxu0 0
    %212 = vmatpush1.bf16.msra.mxu0 %v198
    %213 = vmatprep.subr.bf16.mxu0 0
    %214 = vmatpush1.bf16.msra.mxu0 %v199
    %215 = vmatprep.subr.bf16.mxu0 0
    %216 = vmatpush1.bf16.msra.mxu0 %v200
    %217 = vmatprep.subr.bf16.mxu0 0
    %218 = vmatpush1.bf16.msra.mxu0 0
    %219 = vmatprep.subr.bf16.mxu0 0
    %220 = vmatpush1.bf16.msra.mxu0 0
    %221 = vmatprep.subr.bf16.mxu0 0
    %222 = vmatpush1.bf16.msra.mxu0 0
    %223 = vmatprep.subr.bf16.mxu0 0
    %224 = vmatpush1.bf16.msra.mxu0 0
    %225 = vmatprep.subr.bf16.mxu0 0
    %226 = vmatpush1.bf16.msra.mxu0 0
    %227 = vmatprep.subr.bf16.mxu0 0
    %228 = vmatpush1.bf16.msra.mxu0 0
    %229 = vmatprep.subr.bf16.mxu0 0
    %230 = vmatpush1.bf16.msra.mxu0 0
    %231 = vmatprep.subr.bf16.mxu0 0
    %232 = vmatpush1.bf16.msra.mxu0 0
    %233 = vmatprep.subr.bf16.mxu0 0
    %234 = vmatpush1.bf16.msra.mxu0 0
    %235 = vmatprep.subr.bf16.mxu0 0
    %236 = vmatpush1.bf16.msra.mxu0 0
    %237 = vmatprep.subr.bf16.mxu0 0
    %238 = vmatpush1.bf16.msra.mxu0 0
    %239 = vmatprep.subr.bf16.mxu0 0
    %240 = vmatpush1.bf16.msra.mxu0 0
    %241 = vmatprep.mubr.bf16.mxu0 0
    %242 = vmatmul.mubr.bf16.gmra.mrb[0].mxu0 %v207
    %v243 = vpop.f32.mrb[0].mxu0
    %v244 = vadd.f32 0.0, %v243
    %v245 = vpop.f32.mrb[0].mxu0
    %v246 = vpop.f32.mrb[0].mxu0
    %v247 = vadd.f32 0.0, %v246
    %v248 = vpop.f32.mrb[0].mxu0
    %249 = vdwg.mxu0
    %v250 = vadd.f32 %v170, %v244
    %v251 = vadd.f32 %v171, %v247
    %252 = vst.msk [vmem:[#allocation2] sm:$0xff] %vm123, %v250
    %253 = vst.msk [vmem:[#allocation2 + $0x8] sm:$0xff] %vm123, %v251
    // Predicated region
    $region46: #{tpu_custom_call.1} parent=1 // pred_check
      %p254 = pneg %p86
    $region47: #{tpu_custom_call.1} parent=1 // pred_check_branch
      %256 = sbr.rel (%p254) target = $region49
    $region48: #{tpu_custom_call.1} parent=1 // pred_region
      %v257 = vld [vmem:[#allocation2] sm:$0xff]
      %v258 = vld [vmem:[#allocation2 + $0x8] sm:$0xff]
      %v259 = vld [vmem:[#allocation11] sm:$0x1]
      %v261 = vlaneseq
      %v262 = vshrl.u32 %v261, 7
      %v263 = vsub.s32 0, %v262
      %v264 = vrot.slane %v259, %v263
      %v266 = vadd.f32 %v257, %v264
      %v267 = vadd.f32 %v258, %v264
      %268 = vst.msk [vmem:[#allocation12] sm:$0xff] %vm123, %v266
      %269 = vst.msk [vmem:[#allocation12 + $0x8] sm:$0xff] %vm123, %v267
    $region49: #{tpu_custom_call.1} parent=1 // pred_fallthru
      _
    // Predicated region
    $region50: #{tpu_custom_call.1} parent=1 // pred_check
      _
    $region51: #{tpu_custom_call.1} parent=1 // pred_check_branch
      %271 = sbr.rel (0) target = $region53
    $region52: #{tpu_custom_call.1} parent=1 // pred_region
      %s273 = ssub.s32 256, 256
      %274 = vsyncadd [#allocation5], %s273
      %s275 = sshll.u32 [#allocation12], 4
      %s276 = int_to_ptr.vmem [resolvable:$true] %s275
      %281 = dma.vmem_to_hbm [thread:$0]  %s276, 256, %s5, [#allocation5], 128, 128, 8
    $region53: #{tpu_custom_call.1} parent=1 // pred_fallthru
      _
    // Predicated region
    $region54: #{tpu_custom_call.1} parent=1 // pred_check
      _
    $region55: #{tpu_custom_call.1} parent=1 // pred_check_branch
      %283 = sbr.rel (0) target = $region57
    $region56: #{tpu_custom_call.1} parent=1 // pred_region
      %284 = dma.done [#allocation5], 256
    $region57: #{tpu_custom_call.1} parent=1 // pred_fallthru
      _
    %285 = vsyncpa [#allocation4], 1
    %286 = vsyncpa [#allocation7], 1
    %287 = vsyncpa [#allocation10], 1
    %288 = vsyncpa [#allocation5], 1

</llo_original>
